<compile_context>
chip_gen: v6e
topology: v6e:2x2x1
jax: 0.10.0
libtpu: 0.0.40
codegen_flags: <defaults>
</compile_context>

<pallas_src>
import functools

import jax
import jax.numpy as jnp
from jax.experimental import pallas as pl
from jax.experimental.pallas import tpu as pltpu

LANE = 128
SUBLANE_BF16 = 16  # minimum bf16 tile rows


def _round_up(x, m):
    return ((x + m - 1) // m) * m


def _cdiv(a, b):
    return -(-a // b)


# ----------------------------------------------------------------------------
# Pallas kernel: fused multi-layer  h = relu(h @ W_l + b_l),  last layer no relu
# ----------------------------------------------------------------------------
def _make_mlp_kernel(num_layers):
    """Kernel args: x_ref, w_0, b_0, ..., w_{L-1}, b_{L-1}, o_ref."""

    def kernel(x_ref, *refs):
        o_ref = refs[-1]
        h = x_ref[...].astype(jnp.bfloat16)          # cast in VMEM (x is f32 in HBM)
        for l in range(num_layers):
            w_ref = refs[2 * l]                      # (K_l, N_l) bf16
            b_ref = refs[2 * l + 1]                  # (1,   N_l) f32
            acc = jnp.dot(h, w_ref[...],
                          preferred_element_type=jnp.float32)
            acc = acc + b_ref[...]                   # f32 epilogue
            if l < num_layers - 1:
                h = jnp.maximum(acc, 0.0).astype(jnp.bfloat16)  # ReLU, bf16 feed
            else:
                o_ref[...] = acc.astype(o_ref.dtype)

    return kernel


# ----------------------------------------------------------------------------
# One-time parameter re-layout (call OUTSIDE jit).
# ----------------------------------------------------------------------------
def prepare_params(params):
    """Transpose / zero-pad / cast Linear params to TPU layout.

    params: list of (w, b) with w: (out_features, in_features), b: (out_features,)

    Interior dims are padded to 128 lanes; the first layer's K and the last
    layer's N stay unpadded so x / the output need no wrapper-side pad/slice.
    """
    num_layers = len(params)
    weights, biases = [], []
    for l, (w, b) in enumerate(params):
        out_f, in_f = w.shape
        in_p = in_f if l == 0 else _round_up(in_f, LANE)
        out_p = out_f if l == num_layers - 1 else _round_up(out_f, LANE)
        wp = jnp.zeros((in_p, out_p), jnp.bfloat16)
        wp = wp.at[:in_f, :out_f].set(jnp.transpose(w).astype(jnp.bfloat16))
        bp = jnp.zeros((1, out_p), jnp.float32)
        bp = bp.at[0, :out_f].set(b.astype(jnp.float32))
        weights.append(wp)
        biases.append(bp)
    return {"weights": weights, "biases": biases}


# ----------------------------------------------------------------------------
# Wrapper: VMEM budgeting, tiling, BlockSpecs, grid.
# ----------------------------------------------------------------------------
def _const_spec(shape):
    """Grid-invariant (weight/bias) spec, single-buffered when supported."""
    idx = lambda i: (0, 0)
    try:
        return pl.BlockSpec(shape, idx, pipeline_mode=pl.Buffered(1))
    except Exception:  # older JAX without pipeline_mode / Buffered
        return pl.BlockSpec(shape, idx)


def fc_forward(x, prepped, *, tm=512):
    """x: (M, input_size) f32 -> (M, output_size) f32."""
    weights = prepped["weights"]
    biases = prepped["biases"]
    num_layers = len(weights)

    M, K = x.shape
    assert K == weights[0].shape[0], (K, weights[0].shape[0])
    out_features = weights[-1].shape[1]

    # ---- Generation-aware VMEM budget -------------------------------------
    try:
        vmem_cap = int(pltpu.get_tpu_info().vmem_capacity_bytes)
    except Exception:
        vmem_cap = 64 * 1024 * 1024  # conservative (v7x-sized)
    # ~52 MiB on v7x (64 MiB parts), ~100 MiB on v5e/v6e (128 MiB parts).
    budget = min(int(vmem_cap * 0.8), 100 * 1024 * 1024)

    # Resident (single-buffered) weights + biases.
    resident = sum(w.size * 2 + b.size * 4 for w, b in zip(weights, biases))
    # Per-row live bytes: double-buffered x tile (f32) + double-buffered out
    # tile (f32) + per-layer intermediates (bf16 h + f32 accumulator).
    per_row = 2 * K * 4 + 2 * out_features * 4
    per_row += sum(w.shape[1] * (2 + 4) for w in weights)

    # TODO(synk): if `resident` alone exceeds `budget` (very wide layers), tile
    # the widest layer's N/K with an inner pltpu.emit_pipeline instead of
    # keeping every weight fully VMEM-resident.
    tm_budget = max((budget - resident) // max(per_row, 1), SUBLANE_BF16)
    tm_budget = max((tm_budget // SUBLANE_BF16) * SUBLANE_BF16, SUBLANE_BF16)
    tm_max = max(SUBLANE_BF16, min(_round_up(tm, SUBLANE_BF16), tm_budget))

    # ---- Balanced M tiling; >= 2 tiles when M allows (v7x megacore) --------
    n_tiles = _cdiv(M, tm_max)
    if n_tiles < 2 and M >= 2 * SUBLANE_BF16:
        n_tiles = 2
    tm_eff = min(tm_max, _round_up(_cdiv(M, n_tiles), SUBLANE_BF16))
    grid = (_cdiv(M, tm_eff),)

    # ---- Specs --------------------------------------------------------------
    # x: default double-buffering.  (On v5e with thin layers, raising this to
    # pl.Buffered(3) can hide the exposed x DMA.)
    in_specs = [pl.BlockSpec((tm_eff, K), lambda i: (i, 0))]
    args = [x]
    for w, b in zip(weights, biases):
        in_specs.append(_const_spec(w.shape))
        in_specs.append(_const_spec(b.shape))
        args.extend([w, b])
    out_specs = pl.BlockSpec((tm_eff, out_features), lambda i: (i, 0))

    out = pl.pallas_call(
        _make_mlp_kernel(num_layers),
        out_shape=jax.ShapeDtypeStruct((M, out_features), jnp.float32),
        grid=grid,
        in_specs=in_specs,
        out_specs=out_specs,
        compiler_params=pltpu.CompilerParams(
            dimension_semantics=("parallel",),
            vmem_limit_bytes=int(budget)),
    )(*args)
    return out


# ----------------------------------------------------------------------------
# Pure-JAX reference (mirrors the PyTorch forward, f32).
# ----------------------------------------------------------------------------
def reference_forward(x, params):
    h = x
    for i, (w, b) in enumerate(params):
        h = h @ jnp.transpose(w) + b
        if i < len(params) - 1:
            h = jax.nn.relu(h)
    return h


# ----------------------------------------------------------------------------
# Deterministic parameter init (matches nn.Linear default init scheme).
# ----------------------------------------------------------------------------
def init_params(key, input_size, hidden_sizes, output_size):
    sizes = [input_size] + list(hidden_sizes) + [output_size]
    params = []
    keys = jax.random.split(key, len(sizes) - 1)
    for i in range(len(sizes) - 1):
        fan_in, fan_out = sizes[i], sizes[i + 1]
        kw, kb = jax.random.split(keys[i])
        bound = 1.0 / (fan_in ** 0.5)
        w = jax.random.uniform(kw, (fan_out, fan_in),
                               minval=-bound, maxval=bound, dtype=jnp.float32)
        b = jax.random.uniform(kb, (fan_out,),
                               minval=-bound, maxval=bound, dtype=jnp.float32)
        params.append((w, b))
    return params


if __name__ == "__main__":
    input_size, hidden_sizes, output_size = 64, [128, 96], 32
    batch = 16

    key = jax.random.PRNGKey(0)
    kx, kp = jax.random.split(key)
    x = jax.random.normal(kx, (batch, input_size), dtype=jnp.float32)
    params = init_params(kp, input_size, hidden_sizes, output_size)

    # Weight re-layout / padding / cast happens once, outside the jitted forward.
    prepped = prepare_params(params)

    fwd = jax.jit(functools.partial(fc_forward, tm=512))
    out = jax.block_until_ready(fwd(x, prepped))

    ref = jax.block_until_ready(reference_forward(x, params))
    assert out.shape == (batch, output_size), out.shape
    max_err = float(jnp.max(jnp.abs(out - ref)))
    # bf16 matmul operands with f32 accumulation -> small rounding vs f32 ref.
    assert jnp.allclose(out, ref, atol=5e-2, rtol=5e-2), max_err

    print("KERNEL_OK")
</pallas_src>

<mosaic_0001>
module attributes {stable_mosaic.version = 11 : i64} {
  func.func @kernel(%arg0: i32, %arg1: memref<16x64xf32, #tpu.memory_space<vmem>>, %arg2: memref<64x128xbf16, #tpu.memory_space<vmem>>, %arg3: memref<1x128xf32, #tpu.memory_space<vmem>>, %arg4: memref<128x128xbf16, #tpu.memory_space<vmem>>, %arg5: memref<1x128xf32, #tpu.memory_space<vmem>>, %arg6: memref<128x32xbf16, #tpu.memory_space<vmem>>, %arg7: memref<1x32xf32, #tpu.memory_space<vmem>>, %arg8: memref<16x32xf32, #tpu.memory_space<vmem>>) attributes {dimension_semantics = [#tpu.dimension_semantics<parallel>], iteration_bounds = array<i64: 1>, scalar_prefetch = 0 : i64, scratch_operands = 0 : i64, tpu.core_type = #tpu.core_type<tc>, window_params = [{transform_indices = @transform_0, window_bounds = array<i64: 16, 64>}, {pipeline_mode = #tpu.pipeline_mode<synchronous>, transform_indices = @transform_1, window_bounds = array<i64: 64, 128>}, {pipeline_mode = #tpu.pipeline_mode<synchronous>, transform_indices = @transform_2, window_bounds = array<i64: 1, 128>}, {pipeline_mode = #tpu.pipeline_mode<synchronous>, transform_indices = @transform_3, window_bounds = array<i64: 128, 128>}, {pipeline_mode = #tpu.pipeline_mode<synchronous>, transform_indices = @transform_4, window_bounds = array<i64: 1, 128>}, {pipeline_mode = #tpu.pipeline_mode<synchronous>, transform_indices = @transform_5, window_bounds = array<i64: 128, 32>}, {pipeline_mode = #tpu.pipeline_mode<synchronous>, transform_indices = @transform_6, window_bounds = array<i64: 1, 32>}, {transform_indices = @transform_7, window_bounds = array<i64: 16, 32>}]} {
    %c0 = arith.constant 0 : index
    %c0_0 = arith.constant 0 : index
    %0 = vector.load %arg1[%c0, %c0_0] : memref<16x64xf32, #tpu.memory_space<vmem>>, vector<16x64xf32>
    %1 = arith.truncf %0 : vector<16x64xf32> to vector<16x64xbf16>
    %c0_1 = arith.constant 0 : index
    %c0_2 = arith.constant 0 : index
    %2 = vector.load %arg2[%c0_1, %c0_2] : memref<64x128xbf16, #tpu.memory_space<vmem>>, vector<64x128xbf16>
    %cst = arith.constant dense<0.000000e+00> : vector<16x128xf32>
    %3 = tpu.matmul %1, %2, %cst {dimension_numbers = #tpu.dot_dimension_numbers<[1], [0], [0], [1], [0, 0, 1, 1], [], []>} : vector<16x64xbf16>, vector<64x128xbf16>, vector<16x128xf32> -> vector<16x128xf32>
    %c0_3 = arith.constant 0 : index
    %c0_4 = arith.constant 0 : index
    %4 = vector.load %arg3[%c0_3, %c0_4] : memref<1x128xf32, #tpu.memory_space<vmem>>, vector<1x128xf32>
    %5 = vector.broadcast %4 : vector<1x128xf32> to vector<16x128xf32>
    %6 = arith.addf %3, %5 : vector<16x128xf32>
    %cst_5 = arith.constant 0.000000e+00 : f32
    %7 = vector.broadcast %cst_5 : f32 to vector<16x128xf32>
    %8 = arith.maximumf %6, %7 : vector<16x128xf32>
    %9 = arith.truncf %8 : vector<16x128xf32> to vector<16x128xbf16>
    %c0_6 = arith.constant 0 : index
    %c0_7 = arith.constant 0 : index
    %10 = vector.load %arg4[%c0_6, %c0_7] : memref<128x128xbf16, #tpu.memory_space<vmem>>, vector<128x128xbf16>
    %cst_8 = arith.constant dense<0.000000e+00> : vector<16x128xf32>
    %11 = tpu.matmul %9, %10, %cst_8 {dimension_numbers = #tpu.dot_dimension_numbers<[1], [0], [0], [1], [0, 0, 1, 1], [], []>} : vector<16x128xbf16>, vector<128x128xbf16>, vector<16x128xf32> -> vector<16x128xf32>
    %c0_9 = arith.constant 0 : index
    %c0_10 = arith.constant 0 : index
    %12 = vector.load %arg5[%c0_9, %c0_10] : memref<1x128xf32, #tpu.memory_space<vmem>>, vector<1x128xf32>
    %13 = vector.broadcast %12 : vector<1x128xf32> to vector<16x128xf32>
    %14 = arith.addf %11, %13 : vector<16x128xf32>
    %cst_11 = arith.constant 0.000000e+00 : f32
    %15 = vector.broadcast %cst_11 : f32 to vector<16x128xf32>
    %16 = arith.maximumf %14, %15 : vector<16x128xf32>
    %17 = arith.truncf %16 : vector<16x128xf32> to vector<16x128xbf16>
    %c0_12 = arith.constant 0 : index
    %c0_13 = arith.constant 0 : index
    %18 = vector.load %arg6[%c0_12, %c0_13] : memref<128x32xbf16, #tpu.memory_space<vmem>>, vector<128x32xbf16>
    %cst_14 = arith.constant dense<0.000000e+00> : vector<16x32xf32>
    %19 = tpu.matmul %17, %18, %cst_14 {dimension_numbers = #tpu.dot_dimension_numbers<[1], [0], [0], [1], [0, 0, 1, 1], [], []>} : vector<16x128xbf16>, vector<128x32xbf16>, vector<16x32xf32> -> vector<16x32xf32>
    %c0_15 = arith.constant 0 : index
    %c0_16 = arith.constant 0 : index
    %20 = vector.load %arg7[%c0_15, %c0_16] : memref<1x32xf32, #tpu.memory_space<vmem>>, vector<1x32xf32>
    %21 = vector.broadcast %20 : vector<1x32xf32> to vector<16x32xf32>
    %22 = arith.addf %19, %21 : vector<16x32xf32>
    %c0_17 = arith.constant 0 : index
    %c0_18 = arith.constant 0 : index
    %23 = vector.load %arg8[%c0_17, %c0_18] : memref<16x32xf32, #tpu.memory_space<vmem>>, vector<16x32xf32>
    tpu.vector_store %arg8[%c0_17, %c0_18], %22 {strides = array<i32>} : memref<16x32xf32, #tpu.memory_space<vmem>>, vector<16x32xf32>,
    return
  }
  func.func @transform_0(%arg0: i32) -> (i32, i32) {
    %c0_i32 = arith.constant 0 : i32
    %c0_i32_0 = arith.constant 0 : i32
    return %arg0, %c0_i32 : i32, i32
  }
  func.func @transform_1(%arg0: i32) -> (i32, i32) {
    %c0_i32 = arith.constant 0 : i32
    %c0_i32_0 = arith.constant 0 : i32
    %c0_i32_1 = arith.constant 0 : i32
    return %c0_i32, %c0_i32_0 : i32, i32
  }
  func.func @transform_2(%arg0: i32) -> (i32, i32) {
    %c0_i32 = arith.constant 0 : i32
    %c0_i32_0 = arith.constant 0 : i32
    %c0_i32_1 = arith.constant 0 : i32
    return %c0_i32, %c0_i32_0 : i32, i32
  }
  func.func @transform_3(%arg0: i32) -> (i32, i32) {
    %c0_i32 = arith.constant 0 : i32
    %c0_i32_0 = arith.constant 0 : i32
    %c0_i32_1 = arith.constant 0 : i32
    return %c0_i32, %c0_i32_0 : i32, i32
  }
  func.func @transform_4(%arg0: i32) -> (i32, i32) {
    %c0_i32 = arith.constant 0 : i32
    %c0_i32_0 = arith.constant 0 : i32
    %c0_i32_1 = arith.constant 0 : i32
    return %c0_i32, %c0_i32_0 : i32, i32
  }
  func.func @transform_5(%arg0: i32) -> (i32, i32) {
    %c0_i32 = arith.constant 0 : i32
    %c0_i32_0 = arith.constant 0 : i32
    %c0_i32_1 = arith.constant 0 : i32
    return %c0_i32, %c0_i32_0 : i32, i32
  }
  func.func @transform_6(%arg0: i32) -> (i32, i32) {
    %c0_i32 = arith.constant 0 : i32
    %c0_i32_0 = arith.constant 0 : i32
    %c0_i32_1 = arith.constant 0 : i32
    return %c0_i32, %c0_i32_0 : i32, i32
  }
  func.func @transform_7(%arg0: i32) -> (i32, i32) {
    %c0_i32 = arith.constant 0 : i32
    %c0_i32_0 = arith.constant 0 : i32
    return %arg0, %c0_i32 : i32, i32
  }
}

</mosaic_0001>

<llo_original>
// kernel: fc_forward.1
$region0: #{fc_forward.1}
  #allocation0 [shape = 'u32[]', space=smem, size = 0x4, offset = 0x4, fixed_abs, tag = 'smem constant byte address 0x4 - core index']
  #allocation1 [shape = 'u32[144,128]{1,0:T(1,128)}', space=vmem, size = 0x12000, scoped, tag = 'internal scratch']
  %s0 = inlined_call_operand.vmem [shape: f32[16,64], index: 0, kind: input, shape index: {}]
  %s1 = inlined_call_operand.hbm [shape: bf16[64,128], index: 1, kind: input, shape index: {}]
  %s2 = inlined_call_operand.vmem [shape: f32[1,128], index: 2, kind: input, shape index: {}]
  %s3 = inlined_call_operand.vmem [shape: bf16[128,128], index: 3, kind: input, shape index: {}]
  %s4 = inlined_call_operand.vmem [shape: f32[1,128], index: 4, kind: input, shape index: {}]
  %s5 = inlined_call_operand.vmem [shape: bf16[128,32], index: 5, kind: input, shape index: {}]
  %s6 = inlined_call_operand.vmem [shape: f32[1,32], index: 6, kind: input, shape index: {}]
  %s7 = inlined_call_operand.hbm [shape: f32[16,32], index: 7, kind: output, shape index: {}]
  %s8 = sld [smem:[#allocation0]]
  $region42: #{fc_forward.1} parent=0
    _
  %s10 = ssub.s32 1, %s8
  %s11 = scalar_select 0, %s10, %s8
  $region1: #{fc_forward.1} parent=0
    #allocation2 [shape = 'u8[16384]{0}', space=vmem, size = 0x4000, scoped, tag = 'input window, operand 1, single buffered']
    #allocation3 [shape = 's32[1]{0}', space=sflag, size = 0x4, scoped, tag = 'scoped memory for fc_forward.1']
    #allocation4 [shape = 's32[1]{0}', space=sflag, size = 0x4, scoped, tag = 'scoped memory for fc_forward.1']
    #allocation5 [shape = 'u8[8192]{0}', space=vmem, size = 0x2000, scoped, tag = 'output window, operand 0, single buffered']
    %12 = vsyncpa [#allocation3], 0
    %13 = vsyncpa [#allocation4], 0
    // Predicated region
    $region2: #{fc_forward.1} parent=1 // pred_check
      _
    $region3: #{fc_forward.1} parent=1 // pred_check_branch
      %15 = sbr.rel (0) target = $region5
    $region4: #{fc_forward.1} parent=1 // pred_region
      _
    $region5: #{fc_forward.1} parent=1 // pred_fallthru
      _
    // Predicated region
    $region6: #{fc_forward.1} parent=1 // pred_check
      _
    $region7: #{fc_forward.1} parent=1 // pred_check_branch
      %17 = sbr.rel (0) target = $region9
    $region8: #{fc_forward.1} parent=1 // pred_region
      %s19 = ssub.s32 512, 512
      %20 = vsyncadd [#allocation3], %s19
      %s21 = sshll.u32 [#allocation2], 4
      %s22 = int_to_ptr.vmem [resolvable:$true] %s21
      %27 = dma.hbm_to_vmem [thread:$0]  %s1, 512, %s22, [#allocation3], 64, 64, 4
    $region9: #{fc_forward.1} parent=1 // pred_fallthru
      _
    // Predicated region
    $region10: #{fc_forward.1} parent=1 // pred_check
      _
    $region11: #{fc_forward.1} parent=1 // pred_check_branch
      %29 = sbr.rel (0) target = $region13
    $region12: #{fc_forward.1} parent=1 // pred_region
      _
    $region13: #{fc_forward.1} parent=1 // pred_fallthru
      _
    // Predicated region
    $region14: #{fc_forward.1} parent=1 // pred_check
      _
    $region15: #{fc_forward.1} parent=1 // pred_check_branch
      %31 = sbr.rel (0) target = $region17
    $region16: #{fc_forward.1} parent=1 // pred_region
      _
    $region17: #{fc_forward.1} parent=1 // pred_fallthru
      _
    // Predicated region
    $region18: #{fc_forward.1} parent=1 // pred_check
      _
    $region19: #{fc_forward.1} parent=1 // pred_check_branch
      %33 = sbr.rel (0) target = $region21
    $region20: #{fc_forward.1} parent=1 // pred_region
      _
    $region21: #{fc_forward.1} parent=1 // pred_fallthru
      _
    // Predicated region
    $region22: #{fc_forward.1} parent=1 // pred_check
      _
    $region23: #{fc_forward.1} parent=1 // pred_check_branch
      %35 = sbr.rel (0) target = $region25
    $region24: #{fc_forward.1} parent=1 // pred_region
      _
    $region25: #{fc_forward.1} parent=1 // pred_fallthru
      _
    // Predicated region
    $region26: #{fc_forward.1} parent=1 // pred_check
      _
    $region27: #{fc_forward.1} parent=1 // pred_check_branch
      %37 = sbr.rel (0) target = $region29
    $region28: #{fc_forward.1} parent=1 // pred_region
      _
    $region29: #{fc_forward.1} parent=1 // pred_fallthru
      _
    // Predicated region
    $region30: #{fc_forward.1} parent=1 // pred_check
      _
    $region31: #{fc_forward.1} parent=1 // pred_check_branch
      %39 = sbr.rel (0) target = $region33
    $region32: #{fc_forward.1} parent=1 // pred_region
      %40 = dma.done [#allocation3], 512
    $region33: #{fc_forward.1} parent=1 // pred_fallthru
      _
    %v42 = vld [vmem:[%s0] sm:$0xff]
    %v43 = vld [vmem:[%s0 + $0x8] sm:$0xff]
    %v44 = vpack.c.bf16 %v43, %v42
    %v45 = vld [vmem:[#allocation2] sm:$0xf]
    %v46 = vld [vmem:[#allocation2 + $0x4] sm:$0xf]
    %v47 = vld [vmem:[#allocation2 + $0x8] sm:$0xf]
    %v48 = vld [vmem:[#allocation2 + $0xc] sm:$0xf]
    %v49 = vld [vmem:[#allocation2 + $0x10] sm:$0xf]
    %v50 = vld [vmem:[#allocation2 + $0x14] sm:$0xf]
    %v51 = vld [vmem:[#allocation2 + $0x18] sm:$0xf]
    %v52 = vld [vmem:[#allocation2 + $0x1c] sm:$0xf]
    %v53 = vld [vmem:[%s2] sm:$0x1]
    %v55 = vlaneseq
    %v56 = vshrl.u32 %v55, 7
    %v57 = vsub.s32 0, %v56
    %v58 = vrot.slane %v53, %v57
    %v68 = vunpack.c.l.b16 %v45
    %v69 = vunpack.c.l.b16 %v46
    %v70 = vunpack.c.l.b16 %v47
    %v71 = vunpack.c.l.b16 %v48
    %v72 = vunpack.c.l.b16 %v49
    %v73 = vunpack.c.l.b16 %v50
    %v74 = vunpack.c.l.b16 %v51
    %v75 = vunpack.c.l.b16 %v52
    %v76 = vpack.c.b16 %v69, %v68
    %v77 = vpack.c.b16 %v71, %v70
    %v78 = vpack.c.b16 %v73, %v72
    %v79 = vpack.c.b16 %v75, %v74
    %vm84 = vcmask 523264
    %v86 = vsel %vm84, %v44, 0
    %88 = vmatprep.subr.bf16.mxu0 0
    %89 = vmatpush1.bf16.msra.mxu0 0
    %90 = vmatprep.subr.bf16.mxu0 0
    %91 = vmatpush1.bf16.msra.mxu0 0
    %92 = vmatprep.subr.bf16.mxu0 0
    %93 = vmatpush1.bf16.msra.mxu0 0
    %94 = vmatprep.subr.bf16.mxu0 0
    %95 = vmatpush1.bf16.msra.mxu0 0
    %96 = vmatprep.subr.bf16.mxu0 0
    %97 = vmatpush1.bf16.msra.mxu0 %v79
    %98 = vmatprep.subr.bf16.mxu0 0
    %99 = vmatpush1.bf16.msra.mxu0 %v78
    %100 = vmatprep.subr.bf16.mxu0 0
    %101 = vmatpush1.bf16.msra.mxu0 %v77
    %102 = vmatprep.subr.bf16.mxu0 0
    %103 = vmatpush1.bf16.msra.mxu0 %v76
    %104 = vmatprep.subr.bf16.mxu0 0
    %105 = vmatpush2.bf16.msra.mxu0 0
    %106 = vmatprep.subr.bf16.mxu0 0
    %107 = vmatpush2.bf16.msra.mxu0 0
    %108 = vmatprep.subr.bf16.mxu0 0
    %109 = vmatpush2.bf16.msra.mxu0 0
    %110 = vmatprep.subr.bf16.mxu0 0
    %111 = vmatpush2.bf16.msra.mxu0 0
    %112 = vmatprep.subr.bf16.mxu0 0
    %113 = vmatpush2.bf16.msra.mxu0 0
    %114 = vmatprep.subr.bf16.mxu0 0
    %115 = vmatpush2.bf16.msra.mxu0 0
    %116 = vmatprep.subr.bf16.mxu0 0
    %117 = vmatpush2.bf16.msra.mxu0 0
    %118 = vmatprep.subr.bf16.mxu0 0
    %119 = vmatpush2.bf16.msra.mxu0 0
    %120 = vmatprep.mubr.bf16.mxu0 0
    %121 = vmatmul.mubr.bf16.gmra.mxu0 %v86
    %v122 = vpop.f32.mrf.mxu0
    %v123 = vadd.f32 %v58, %v122
    %v124 = vpop.f32.mrf.mxu0
    %v125 = vpop.f32.mrf.mxu0
    %v126 = vadd.f32 %v58, %v125
    %v127 = vpop.f32.mrf.mxu0
    %128 = vdwg.mxu0
    %v129 = vmax.f32 %v123, 0.0
    %v130 = vmax.f32 %v126, 0.0
    %v131 = vpack.c.bf16 %v130, %v129
    %v132 = vld [vmem:[%s3] sm:$0xf]
    %v133 = vld [vmem:[%s3 + $0x4] sm:$0xf]
    %v134 = vld [vmem:[%s3 + $0x8] sm:$0xf]
    %v135 = vld [vmem:[%s3 + $0xc] sm:$0xf]
    %v136 = vld [vmem:[%s3 + $0x10] sm:$0xf]
    %v137 = vld [vmem:[%s3 + $0x14] sm:$0xf]
    %v138 = vld [vmem:[%s3 + $0x18] sm:$0xf]
    %v139 = vld [vmem:[%s3 + $0x1c] sm:$0xf]
    %v140 = vld [vmem:[%s3 + $0x20] sm:$0xf]
    %v141 = vld [vmem:[%s3 + $0x24] sm:$0xf]
    %v142 = vld [vmem:[%s3 + $0x28] sm:$0xf]
    %v143 = vld [vmem:[%s3 + $0x2c] sm:$0xf]
    %v144 = vld [vmem:[%s3 + $0x30] sm:$0xf]
    %v145 = vld [vmem:[%s3 + $0x34] sm:$0xf]
    %v146 = vld [vmem:[%s3 + $0x38] sm:$0xf]
    %v147 = vld [vmem:[%s3 + $0x3c] sm:$0xf]
    %v148 = vld [vmem:[%s4] sm:$0x1]
    %v150 = vlaneseq
    %v151 = vshrl.u32 %v150, 7
    %v152 = vsub.s32 0, %v151
    %v153 = vrot.slane %v148, %v152
    %v171 = vunpack.c.l.b16 %v132
    %v172 = vunpack.c.l.b16 %v133
    %v173 = vunpack.c.l.b16 %v134
    %v174 = vunpack.c.l.b16 %v135
    %v175 = vunpack.c.l.b16 %v136
    %v176 = vunpack.c.l.b16 %v137
    %v177 = vunpack.c.l.b16 %v138
    %v178 = vunpack.c.l.b16 %v139
    %v179 = vunpack.c.l.b16 %v140
    %v180 = vunpack.c.l.b16 %v141
    %v181 = vunpack.c.l.b16 %v142
    %v182 = vunpack.c.l.b16 %v143
    %v183 = vunpack.c.l.b16 %v144
    %v184 = vunpack.c.l.b16 %v145
    %v185 = vunpack.c.l.b16 %v146
    %v186 = vunpack.c.l.b16 %v147
    %v187 = vpack.c.b16 %v172, %v171
    %v188 = vpack.c.b16 %v174, %v173
    %v189 = vpack.c.b16 %v176, %v175
    %v190 = vpack.c.b16 %v178, %v177
    %v191 = vpack.c.b16 %v180, %v179
    %v192 = vpack.c.b16 %v182, %v181
    %v193 = vpack.c.b16 %v184, %v183
    %v194 = vpack.c.b16 %v186, %v185
    %203 = vmatprep.subr.bf16.mxu0 0
    %204 = vmatpush1.bf16.msra.mxu0 %v194
    %205 = vmatprep.subr.bf16.mxu0 0
    %206 = vmatpush1.bf16.msra.mxu0 %v193
    %207 = vmatprep.subr.bf16.mxu0 0
    %208 = vmatpush1.bf16.msra.mxu0 %v192
    %209 = vmatprep.subr.bf16.mxu0 0
    %210 = vmatpush1.bf16.msra.mxu0 %v191
    %211 = vmatprep.subr.bf16.mxu0 0
    %212 = vmatpush1.bf16.msra.mxu0 %v190
    %213 = vmatprep.subr.bf16.mxu0 0
    %214 = vmatpush1.bf16.msra.mxu0 %v189
    %215 = vmatprep.subr.bf16.mxu0 0
    %216 = vmatpush1.bf16.msra.mxu0 %v188
    %217 = vmatprep.subr.bf16.mxu0 0
    %218 = vmatpush1.bf16.msra.mxu0 %v187
    %219 = vmatprep.subr.bf16.mxu0 0
    %220 = vmatpush2.bf16.msra.mxu0 0
    %221 = vmatprep.subr.bf16.mxu0 0
    %222 = vmatpush2.bf16.msra.mxu0 0
    %223 = vmatprep.subr.bf16.mxu0 0
    %224 = vmatpush2.bf16.msra.mxu0 0
    %225 = vmatprep.subr.bf16.mxu0 0
    %226 = vmatpush2.bf16.msra.mxu0 0
    %227 = vmatprep.subr.bf16.mxu0 0
    %228 = vmatpush2.bf16.msra.mxu0 0
    %229 = vmatprep.subr.bf16.mxu0 0
    %230 = vmatpush2.bf16.msra.mxu0 0
    %231 = vmatprep.subr.bf16.mxu0 0
    %232 = vmatpush2.bf16.msra.mxu0 0
    %233 = vmatprep.subr.bf16.mxu0 0
    %234 = vmatpush2.bf16.msra.mxu0 0
    %235 = vmatprep.mubr.bf16.mxu0 0
    %236 = vmatmul.mubr.bf16.gmra.mxu0 %v131
    %v237 = vpop.f32.mrf.mxu0
    %v238 = vadd.f32 %v153, %v237
    %v239 = vpop.f32.mrf.mxu0
    %v240 = vpop.f32.mrf.mxu0
    %v241 = vadd.f32 %v153, %v240
    %v242 = vpop.f32.mrf.mxu0
    %243 = vdwg.mxu0
    %v244 = vmax.f32 %v238, 0.0
    %v245 = vmax.f32 %v241, 0.0
    %v246 = vpack.c.bf16 %v245, %v244
    %v247 = vld [vmem:[%s5] sm:$0xf]
    %v248 = vld [vmem:[%s5 + $0x4] sm:$0xf]
    %v249 = vld [vmem:[%s5 + $0x8] sm:$0xf]
    %v250 = vld [vmem:[%s5 + $0xc] sm:$0xf]
    %v251 = vld [vmem:[%s5 + $0x10] sm:$0xf]
    %v252 = vld [vmem:[%s5 + $0x14] sm:$0xf]
    %v253 = vld [vmem:[%s5 + $0x18] sm:$0xf]
    %v254 = vld [vmem:[%s5 + $0x1c] sm:$0xf]
    %v255 = vld [vmem:[%s5 + $0x20] sm:$0xf]
    %v256 = vld [vmem:[%s5 + $0x24] sm:$0xf]
    %v257 = vld [vmem:[%s5 + $0x28] sm:$0xf]
    %v258 = vld [vmem:[%s5 + $0x2c] sm:$0xf]
    %v259 = vld [vmem:[%s5 + $0x30] sm:$0xf]
    %v260 = vld [vmem:[%s5 + $0x34] sm:$0xf]
    %v261 = vld [vmem:[%s5 + $0x38] sm:$0xf]
    %v262 = vld [vmem:[%s5 + $0x3c] sm:$0xf]
    %v263 = vld [vmem:[%s6] sm:$0x1]
    %v265 = vlaneseq
    %v266 = vshrl.u32 %v265, 7
    %v267 = vsub.s32 0, %v266
    %v268 = vrot.slane %v263, %v267
    %v286 = vunpack.c.l.b16 %v247
    %v287 = vunpack.c.l.b16 %v248
    %v288 = vunpack.c.l.b16 %v249
    %v289 = vunpack.c.l.b16 %v250
    %v290 = vunpack.c.l.b16 %v251
    %v291 = vunpack.c.l.b16 %v252
    %v292 = vunpack.c.l.b16 %v253
    %v293 = vunpack.c.l.b16 %v254
    %v294 = vunpack.c.l.b16 %v255
    %v295 = vunpack.c.l.b16 %v256
    %v296 = vunpack.c.l.b16 %v257
    %v297 = vunpack.c.l.b16 %v258
    %v298 = vunpack.c.l.b16 %v259
    %v299 = vunpack.c.l.b16 %v260
    %v300 = vunpack.c.l.b16 %v261
    %v301 = vunpack.c.l.b16 %v262
    %v302 = vpack.c.b16 %v287, %v286
    %v303 = vpack.c.b16 %v289, %v288
    %v304 = vpack.c.b16 %v291, %v290
    %v305 = vpack.c.b16 %v293, %v292
    %v306 = vpack.c.b16 %v295, %v294
    %v307 = vpack.c.b16 %v297, %v296
    %v308 = vpack.c.b16 %v299, %v298
    %v309 = vpack.c.b16 %v301, %v300
    %318 = vmatprep.subr.bf16.mxu0 0
    %319 = vmatpush1.bf16.msra.mxu0 %v309
    %320 = vmatprep.subr.bf16.mxu0 0
    %321 = vmatpush1.bf16.msra.mxu0 %v308
    %322 = vmatprep.subr.bf16.mxu0 0
    %323 = vmatpush1.bf16.msra.mxu0 %v307
    %324 = vmatprep.subr.bf16.mxu0 0
    %325 = vmatpush1.bf16.msra.mxu0 %v306
    %326 = vmatprep.subr.bf16.mxu0 0
    %327 = vmatpush1.bf16.msra.mxu0 %v305
    %328 = vmatprep.subr.bf16.mxu0 0
    %329 = vmatpush1.bf16.msra.mxu0 %v304
    %330 = vmatprep.subr.bf16.mxu0 0
    %331 = vmatpush1.bf16.msra.mxu0 %v303
    %332 = vmatprep.subr.bf16.mxu0 0
    %333 = vmatpush1.bf16.msra.mxu0 %v302
    %334 = vmatprep.subr.bf16.mxu0 0
    %335 = vmatpush2.bf16.msra.mxu0 0
    %336 = vmatprep.subr.bf16.mxu0 0
    %337 = vmatpush2.bf16.msra.mxu0 0
    %338 = vmatprep.subr.bf16.mxu0 0
    %339 = vmatpush2.bf16.msra.mxu0 0
    %340 = vmatprep.subr.bf16.mxu0 0
    %341 = vmatpush2.bf16.msra.mxu0 0
    %342 = vmatprep.subr.bf16.mxu0 0
    %343 = vmatpush2.bf16.msra.mxu0 0
    %344 = vmatprep.subr.bf16.mxu0 0
    %345 = vmatpush2.bf16.msra.mxu0 0
    %346 = vmatprep.subr.bf16.mxu0 0
    %347 = vmatpush2.bf16.msra.mxu0 0
    %348 = vmatprep.subr.bf16.mxu0 0
    %349 = vmatpush2.bf16.msra.mxu0 0
    %350 = vmatprep.mubr.bf16.mxu0 0
    %351 = vmatmul.mubr.bf16.gmra.mxu0 %v246
    %v352 = vpop.f32.mrf.mxu0
    %v353 = vadd.f32 %v268, %v352
    %v354 = vpop.f32.mrf.mxu0
    %v355 = vpop.f32.mrf.mxu0
    %v356 = vadd.f32 %v268, %v355
    %v357 = vpop.f32.mrf.mxu0
    %358 = vdwg.mxu0
    %vm359 = vcmask 261120
    %360 = vst.msk [vmem:[#allocation5] sm:$0xff] %vm359, %v353
    %361 = vst.msk [vmem:[#allocation5 + $0x8] sm:$0xff] %vm359, %v356
    // Predicated region
    $region34: #{fc_forward.1} parent=1 // pred_check
      _
    $region35: #{fc_forward.1} parent=1 // pred_check_branch
      %363 = sbr.rel (0) target = $region37
    $region36: #{fc_forward.1} parent=1 // pred_region
      %s365 = ssub.s32 256, 256
      %366 = vsyncadd [#allocation4], %s365
      %s367 = sshll.u32 [#allocation5], 4
      %s368 = int_to_ptr.vmem [resolvable:$true] %s367
      %373 = dma.vmem_to_hbm [thread:$0]  %s368, 256, %s7, [#allocation4], 128, 128, 8
    $region37: #{fc_forward.1} parent=1 // pred_fallthru
      _
    // Predicated region
    $region38: #{fc_forward.1} parent=1 // pred_check
      _
    $region39: #{fc_forward.1} parent=1 // pred_check_branch
      %375 = sbr.rel (0) target = $region41
    $region40: #{fc_forward.1} parent=1 // pred_region
      %376 = dma.done [#allocation4], 256
    $region41: #{fc_forward.1} parent=1 // pred_fallthru
      _
    %377 = vsyncpa [#allocation3], 1
    %378 = vsyncpa [#allocation4], 1

</llo_original>
